<compile_context>
chip_gen: v7x
topology: tpu7x:2x2x1
jax: 0.10.0
libtpu: 0.0.40
codegen_flags: <defaults>
</compile_context>

<pallas_src>
import functools
import math

import jax
import jax.numpy as jnp
from jax.experimental import pallas as pl
from jax.experimental.pallas import tpu as pltpu


_LANES = 128
_VMEM_LIMIT_BYTES = 48 * 1024 * 1024          # explicit; fits all of v5e/v6e/v7x
_VMEM_BUDGET_BYTES = int(_VMEM_LIMIT_BYTES * 0.75)


def _round_up(x, m):
    return (x + m - 1) // m * m


# --------------------------------------------------------------------------
# Kernel body: one batch tile, all k sub-MLPs fused into two MXU matmuls.
# --------------------------------------------------------------------------
def _fused_mlp_kernel(x_ref, w1_ref, b1_ref, w2_ref, b2_ref, o_ref):
    # x_ref : (TB, In)            w1_ref: (In, kH_pad)    b1_ref: (1, kH_pad) f32
    # w2_ref: (kH_pad, kO_pad)    b2_ref: (1, kO_pad) f32 o_ref : (TB, kO_pad)
    x = x_ref[...]
    # Layer 1: one MXU call covering all k sub-MLPs; f32 accumulation.
    # Bias add + tanh stay in f32 (no bf16 VPU/EUP dependence on v5e).
    h = jnp.tanh(
        jnp.dot(x, w1_ref[...], preferred_element_type=jnp.float32)
        + b1_ref[...]
    )
    # Layer 2: single block-diagonal matmul -> lane-dense (TB, kO_pad) slab.
    y = (
        jnp.dot(h.astype(w2_ref.dtype), w2_ref[...],
                preferred_element_type=jnp.float32)
        + b2_ref[...]
    )
    o_ref[...] = y.astype(o_ref.dtype)


# --------------------------------------------------------------------------
# One-time parameter repack (call ONCE, outside the forward / training step).
# --------------------------------------------------------------------------
def pack_params(params, compute_dtype=None):
    """Repack PyTorch-layout params into the kernel layout.

    params: (w1, b1, w2, b2) with shapes
            (k,H,In), (k,1,H), (k,Out,H), (k,1,Out)
    compute_dtype: dtype fed to the MXU (e.g. jnp.bfloat16).  Default: w1.dtype.
    Returns (packed_arrays, meta) where meta = {"k": k, "out_size": Out}.
    """
    w1, b1, w2, b2 = params
    k, hidden, in_size = w1.shape
    out_size = w2.shape[1]
    kh, ko = k * hidden, k * out_size
    kh_pad = _round_up(kh, _LANES)
    ko_pad = _round_up(ko, _LANES)
    wdtype = jnp.dtype(compute_dtype) if compute_dtype is not None else w1.dtype

    # W1: (k, H, In) -> (In, k*H), column index = kk*H + hh, lane-padded.
    w1_all = jnp.transpose(w1, (2, 0, 1)).reshape(in_size, kh)
    w1_all = jnp.pad(w1_all, ((0, 0), (0, kh_pad - kh))).astype(wdtype)
    # Biases stay f32 (added onto the f32 accumulator inside the kernel).
    b1_all = jnp.pad(b1.reshape(1, kh).astype(jnp.float32),
                     ((0, 0), (0, kh_pad - kh)))

    # W2: (k, Out, H) -> block-diagonal (k*H, k*Out) of W2[i].T blocks,
    # built in a single vectorized pass, then lane-padded.
    w2_t = jnp.transpose(w2, (0, 2, 1))                      # (k, H, Out)
    eye = jnp.eye(k, dtype=w2.dtype)                         # (k, k)
    w2_bd = w2_t[:, None] * eye[:, :, None, None]            # (k, k, H, Out)
    w2_bd = jnp.transpose(w2_bd, (0, 2, 1, 3)).reshape(kh, ko)
    w2_bd = jnp.pad(w2_bd, ((0, kh_pad - kh), (0, ko_pad - ko))).astype(wdtype)
    b2_all = jnp.pad(b2.reshape(1, ko).astype(jnp.float32),
                     ((0, 0), (0, ko_pad - ko)))

    packed = (w1_all, b1_all, w2_bd, b2_all)
    meta = {"k": int(k), "out_size": int(out_size)}
    return packed, meta


# --------------------------------------------------------------------------
# Batch tiling: explicit VMEM budget, always >= 2 tiles (v7x megacore).
# --------------------------------------------------------------------------
def _choose_batch_tiling(batch, in_size, kh_pad, ko_pad, dsize):
    # Resident operands (double-buffered by default): W1, b1, W2_bd, b2.
    weight_bytes = 2 * ((in_size * kh_pad + kh_pad * ko_pad) * dsize
                        + (kh_pad + ko_pad) * 4)
    avail = max(_VMEM_BUDGET_BYTES - weight_bytes, 1 << 20)
    # Per batch-row: x + out tiles (double-buffered, wdtype) plus the f32
    # hidden / accumulator live values inside the body.
    per_row = 2 * (in_size + ko_pad) * dsize + (kh_pad + ko_pad) * 4
    tb_cap = max(8, (avail // per_row) // 8 * 8)

    for tb in (1024, 512, 256, 128):
        if tb <= tb_cap and batch >= 2 * tb:
            return tb, _round_up(batch, tb)
    # Small batch: still split into >= 2 sublane-aligned tiles so both v7x
    # TensorCores get work; padded rows are sliced off in the wrapper.
    tb = min(max(8, _round_up(-(-batch // 2), 8)), tb_cap)
    return tb, max(_round_up(batch, tb), 2 * tb)


# --------------------------------------------------------------------------
# Forward (jitted).  Takes the pre-packed params; no relayout in here.
# --------------------------------------------------------------------------
@functools.partial(jax.jit, static_argnames=("k", "out_size"))
def mlp_to_k_vecs_stacked(x, packed, *, k, out_size):
    """Returns stacked output of shape (k, B, out_size)."""
    w1_all, b1_all, w2_bd, b2_all = packed
    batch, in_size = x.shape
    kh_pad = w1_all.shape[1]
    ko_pad = w2_bd.shape[1]
    wdtype = w1_all.dtype
    dsize = jnp.dtype(wdtype).itemsize
    out_dtype = x.dtype

    # Feed the MXU its native operand dtype (bf16 path halves x DMA too).
    x = x.astype(wdtype)

    tb, padded_batch = _choose_batch_tiling(batch, in_size, kh_pad, ko_pad, dsize)
    if padded_batch != batch:
        x = jnp.pad(x, ((0, padded_batch - batch), (0, 0)))
    nb = padded_batch // tb

    grid_spec = pltpu.PrefetchScalarGridSpec(
        num_scalar_prefetch=0,
        grid=(nb,),
        in_specs=[
            pl.BlockSpec((tb, in_size), lambda i: (i, 0)),      # x (batch-tiled)
            pl.BlockSpec((in_size, kh_pad), lambda i: (0, 0)),  # W1_all (resident)
            pl.BlockSpec((1, kh_pad), lambda i: (0, 0)),        # b1_all (resident)
            pl.BlockSpec((kh_pad, ko_pad), lambda i: (0, 0)),   # W2 block-diag
            pl.BlockSpec((1, ko_pad), lambda i: (0, 0)),        # b2_all
        ],
        out_specs=pl.BlockSpec((tb, ko_pad), lambda i: (i, 0)), # lane-dense slab
    )

    y_all = pl.pallas_call(
        _fused_mlp_kernel,
        out_shape=jax.ShapeDtypeStruct((padded_batch, ko_pad), out_dtype),
        grid_spec=grid_spec,
        compiler_params=pltpu.CompilerParams(
            dimension_semantics=("parallel",),
            vmem_limit_bytes=_VMEM_LIMIT_BYTES,
        ),
    )(x, w1_all, b1_all, w2_bd, b2_all)

    # Strip batch/lane padding; (B, k*Out) -> (k, B, Out).  Pure layout plumbing.
    y_all = y_all[:batch, : k * out_size]
    return jnp.transpose(y_all.reshape(batch, k, out_size), (1, 0, 2))


def mlp_to_k_vecs(x, packed, *, k, out_size):
    """Mirrors MLP_To_k_Vecs.forward: returns a python list of k (B, Out) arrays."""
    stacked = mlp_to_k_vecs_stacked(x, packed, k=k, out_size=out_size)
    return list(stacked)


# --------------------------------------------------------------------------
# Init + pure-JAX reference (PyTorch semantics) + self-test.
# --------------------------------------------------------------------------
def init_params(key, input_size, hidden_size, output_size, k, dtype=jnp.float32):
    """Deterministic PyTorch-style Linear init: U(-1/sqrt(fan_in), 1/sqrt(fan_in))."""
    k1, k2, k3, k4 = jax.random.split(key, 4)
    bound1 = 1.0 / math.sqrt(input_size)
    bound2 = 1.0 / math.sqrt(hidden_size)
    w1 = jax.random.uniform(k1, (k, hidden_size, input_size), dtype,
                            minval=-bound1, maxval=bound1)
    b1 = jax.random.uniform(k2, (k, 1, hidden_size), dtype,
                            minval=-bound1, maxval=bound1)
    w2 = jax.random.uniform(k3, (k, output_size, hidden_size), dtype,
                            minval=-bound2, maxval=bound2)
    b2 = jax.random.uniform(k4, (k, 1, output_size), dtype,
                            minval=-bound2, maxval=bound2)
    return w1, b1, w2, b2


def _reference(x, params):
    w1, b1, w2, b2 = params
    outs = []
    for i in range(w1.shape[0]):
        h = jnp.tanh(x @ w1[i].T + b1[i])
        outs.append(h @ w2[i].T + b2[i])
    return outs


if __name__ == "__main__":
    # Small shapes consistent with the module's forward.
    batch, input_size, hidden_size, output_size, k = 8, 32, 64, 16, 3

    key = jax.random.PRNGKey(0)
    kx, kp = jax.random.split(key)
    x = jax.random.normal(kx, (batch, input_size), jnp.float32)
    params = init_params(kp, input_size, hidden_size, output_size, k)
    refs = _reference(x, params)

    # ---- f32 path (matches the PyTorch module numerics) ----
    packed, meta = pack_params(params)                 # one-time repack
    outs = mlp_to_k_vecs(x, packed, **meta)
    outs = [jax.block_until_ready(o) for o in outs]
    for o, r in zip(outs, refs):
        assert o.shape == (batch, output_size)
        assert jnp.allclose(o, r, atol=1e-5, rtol=1e-5), "f32 mismatch vs reference"

    # ---- bf16 MXU path (bf16 operands, f32 accumulation) ----
    packed16, meta16 = pack_params(params, compute_dtype=jnp.bfloat16)
    outs16 = mlp_to_k_vecs(x, packed16, **meta16)
    outs16 = [jax.block_until_ready(o) for o in outs16]
    for o, r in zip(outs16, refs):
        assert o.shape == (batch, output_size)
        assert jnp.allclose(o, r, atol=1e-1, rtol=1e-1), "bf16 path diverged"

    print("KERNEL_OK")
</pallas_src>

<mosaic_0001>
module attributes {stable_mosaic.version = 11 : i64} {
  func.func @_fused_mlp_kernel(%arg0: i32, %arg1: memref<8x32xf32, #tpu.memory_space<vmem>>, %arg2: memref<32x256xf32, #tpu.memory_space<vmem>>, %arg3: memref<1x256xf32, #tpu.memory_space<vmem>>, %arg4: memref<256x128xf32, #tpu.memory_space<vmem>>, %arg5: memref<1x128xf32, #tpu.memory_space<vmem>>, %arg6: memref<8x128xf32, #tpu.memory_space<vmem>>) attributes {dimension_semantics = [#tpu.dimension_semantics<parallel>], iteration_bounds = array<i64: 2>, scalar_prefetch = 0 : i64, scratch_operands = 0 : i64, tpu.core_type = #tpu.core_type<tc>, window_params = [{transform_indices = @transform_0, window_bounds = array<i64: 8, 32>}, {pipeline_mode = #tpu.pipeline_mode<synchronous>, transform_indices = @transform_1, window_bounds = array<i64: 32, 256>}, {pipeline_mode = #tpu.pipeline_mode<synchronous>, transform_indices = @transform_2, window_bounds = array<i64: 1, 256>}, {pipeline_mode = #tpu.pipeline_mode<synchronous>, transform_indices = @transform_3, window_bounds = array<i64: 256, 128>}, {pipeline_mode = #tpu.pipeline_mode<synchronous>, transform_indices = @transform_4, window_bounds = array<i64: 1, 128>}, {transform_indices = @transform_5, window_bounds = array<i64: 8, 128>}]} {
    %c0 = arith.constant 0 : index
    %c0_0 = arith.constant 0 : index
    %0 = vector.load %arg1[%c0, %c0_0] : memref<8x32xf32, #tpu.memory_space<vmem>>, vector<8x32xf32>
    %c0_1 = arith.constant 0 : index
    %c0_2 = arith.constant 0 : index
    %1 = vector.load %arg2[%c0_1, %c0_2] : memref<32x256xf32, #tpu.memory_space<vmem>>, vector<32x256xf32>
    %cst = arith.constant dense<0.000000e+00> : vector<8x256xf32>
    %2 = tpu.matmul %0, %1, %cst {dimension_numbers = #tpu.dot_dimension_numbers<[1], [0], [0], [1], [0, 0, 1, 1], [], []>} : vector<8x32xf32>, vector<32x256xf32>, vector<8x256xf32> -> vector<8x256xf32>
    %c0_3 = arith.constant 0 : index
    %c0_4 = arith.constant 0 : index
    %3 = vector.load %arg3[%c0_3, %c0_4] : memref<1x256xf32, #tpu.memory_space<vmem>>, vector<1x256xf32>
    %4 = vector.broadcast %3 : vector<1x256xf32> to vector<8x256xf32>
    %5 = arith.addf %2, %4 : vector<8x256xf32>
    %6 = math.tanh %5 : vector<8x256xf32>
    %c0_5 = arith.constant 0 : index
    %c0_6 = arith.constant 0 : index
    %7 = vector.load %arg4[%c0_5, %c0_6] : memref<256x128xf32, #tpu.memory_space<vmem>>, vector<256x128xf32>
    %cst_7 = arith.constant dense<0.000000e+00> : vector<8x128xf32>
    %8 = tpu.matmul %6, %7, %cst_7 {dimension_numbers = #tpu.dot_dimension_numbers<[1], [0], [0], [1], [0, 0, 1, 1], [], []>} : vector<8x256xf32>, vector<256x128xf32>, vector<8x128xf32> -> vector<8x128xf32>
    %c0_8 = arith.constant 0 : index
    %c0_9 = arith.constant 0 : index
    %9 = vector.load %arg5[%c0_8, %c0_9] : memref<1x128xf32, #tpu.memory_space<vmem>>, vector<1x128xf32>
    %10 = vector.broadcast %9 : vector<1x128xf32> to vector<8x128xf32>
    %11 = arith.addf %8, %10 : vector<8x128xf32>
    %c0_10 = arith.constant 0 : index
    %c0_11 = arith.constant 0 : index
    %12 = vector.load %arg6[%c0_10, %c0_11] : memref<8x128xf32, #tpu.memory_space<vmem>>, vector<8x128xf32>
    tpu.vector_store %arg6[%c0_10, %c0_11], %11 {strides = array<i32>} : memref<8x128xf32, #tpu.memory_space<vmem>>, vector<8x128xf32>,
    return
  }
  func.func @transform_0(%arg0: i32) -> (i32, i32) {
    %c0_i32 = arith.constant 0 : i32
    %c0_i32_0 = arith.constant 0 : i32
    return %arg0, %c0_i32 : i32, i32
  }
  func.func @transform_1(%arg0: i32) -> (i32, i32) {
    %c0_i32 = arith.constant 0 : i32
    %c0_i32_0 = arith.constant 0 : i32
    %c0_i32_1 = arith.constant 0 : i32
    return %c0_i32, %c0_i32_0 : i32, i32
  }
  func.func @transform_2(%arg0: i32) -> (i32, i32) {
    %c0_i32 = arith.constant 0 : i32
    %c0_i32_0 = arith.constant 0 : i32
    %c0_i32_1 = arith.constant 0 : i32
    return %c0_i32, %c0_i32_0 : i32, i32
  }
  func.func @transform_3(%arg0: i32) -> (i32, i32) {
    %c0_i32 = arith.constant 0 : i32
    %c0_i32_0 = arith.constant 0 : i32
    %c0_i32_1 = arith.constant 0 : i32
    return %c0_i32, %c0_i32_0 : i32, i32
  }
  func.func @transform_4(%arg0: i32) -> (i32, i32) {
    %c0_i32 = arith.constant 0 : i32
    %c0_i32_0 = arith.constant 0 : i32
    %c0_i32_1 = arith.constant 0 : i32
    return %c0_i32, %c0_i32_0 : i32, i32
  }
  func.func @transform_5(%arg0: i32) -> (i32, i32) {
    %c0_i32 = arith.constant 0 : i32
    %c0_i32_0 = arith.constant 0 : i32
    return %arg0, %c0_i32 : i32, i32
  }
}

</mosaic_0001>

<llo_original>
// kernel: mlp_to_k_vecs_stacked.1
$region0: #{mlp_to_k_vecs_stacked.1}
  #allocation0 [shape = 'u32[]', space=smem, size = 0x4, offset = 0x4, fixed_abs, tag = 'smem constant byte address 0x4 - core index']
  #allocation1 [shape = 'u32[144,128]{1,0:T(1,128)}', space=vmem, size = 0x12000, scoped, tag = 'internal scratch']
  %s0 = inlined_call_operand.vmem [shape: f32[16,32], index: 0, kind: input, shape index: {}]
  %s1 = inlined_call_operand.hbm [shape: f32[32,256], index: 1, kind: input, shape index: {}]
  %s2 = inlined_call_operand.vmem [shape: f32[1,256], index: 2, kind: input, shape index: {}]
  %s3 = inlined_call_operand.hbm [shape: f32[256,128], index: 3, kind: input, shape index: {}]
  %s4 = inlined_call_operand.vmem [shape: f32[1,128], index: 4, kind: input, shape index: {}]
  %s5 = inlined_call_operand.vmem [shape: f32[16,128], index: 5, kind: output, shape index: {}]
  %s6 = sld [smem:[#allocation0]]
  $region61: #{mlp_to_k_vecs_stacked.1} parent=0
    _
  %s8 = ssub.s32 1, %s6
  %s9 = scalar_select 0, %s8, %s6
  $region1: #{mlp_to_k_vecs_stacked.1} parent=0
    #allocation2 [shape = 'u8[32768]{0}', space=vmem, size = 0x8000, scoped, tag = 'input window, operand 1, single buffered']
    #allocation3 [shape = 's32[2]{0}', space=sflag, size = 0x8, scoped, tag = 'scoped memory for mlp_to_k_vecs_stacked.1']
    #allocation4 [shape = 'u8[131072]{0}', space=vmem, size = 0x20000, scoped, tag = 'input window, operand 3, single buffered']
    #allocation5 [shape = 's32[1]{0}', space=sflag, size = 0x4, scoped, tag = 'scoped memory for mlp_to_k_vecs_stacked.1']
    %10 = vsyncpa [#allocation3], 0
    %11 = vsyncpa [#allocation5], 0
    loop: start=0, step=1, limit=4
    $region2: #{mlp_to_k_vecs_stacked.1} parent=1 // loop_pre_header
      _
    $region3: #{mlp_to_k_vecs_stacked.1} parent=1 // loop_header
      %s13 = sphi 0, %s17
      %p14 = scmp.ge.s32.totalorder %s13, 4
      %s23 = sphi 0, %s25
      %s26 = sphi 0, %s23
      %s27 = sphi 0, %s26
      %s43 = sphi 0, %s27
      %s47 = sphi 0, %s47
      %s49 = sphi 0, %s47
      %s50 = sphi 0, %s49
      %s64 = sphi 0, %s50
      %s68 = sphi 0, %s68
      %s70 = sphi 0, %s68
      %s71 = sphi 0, %s70
      %s85 = sphi 0, %s71
      %s89 = sphi 0, %s89
      %s91 = sphi 0, %s89
      %s92 = sphi 0, %s91
      %s106 = sphi 0, %s92
      %s110 = sphi 0, %s110
      %s112 = sphi 0, %s110
      %s113 = sphi 0, %s112
      %s127 = sphi 0, %s113
      %s133 = sphi 0, %s135
      %s136 = sphi 0, %s133
      %s137 = sphi 0, %s136
      %s153 = sphi 0, %s137
    $region4: #{mlp_to_k_vecs_stacked.1} parent=1 // loop_header_branch
      %16 = sbr.rel (%p14) target = $region8
    $region5: #{mlp_to_k_vecs_stacked.1} parent=1 // loop_body
      %s18 = ssub.s32 %s13, 1
      %s19 = ssub.s32 %s13, 2
      %s20 = sadd.s32 %s13, 1
      %s21 = ssub.s32 %s13, %s20
      %p22 = scmp.eq.s32.totalorder %s21, 0
      %s24 = sadd.s32 %s23, 1
      %s25 = scalar_select %p22, %s23, %s24
      %p28 = pneg %p22
      %p29 = scmp.eq.s32.totalorder %s13, 1
      %p30 = por %p28, %p29
      %p31 = scmp.ne.s32.totalorder %s23, %s26
      %p32 = scmp.eq.s32.totalorder %s13, 0
      %p33 = por %p31, %p32
      %p34 = scmp.ne.s32.totalorder %s23, %s26
      %p35 = scmp.eq.s32.totalorder %s18, 1
      %p36 = por %p34, %p35
      %p37 = scmp.ne.s32.totalorder %s26, %s27
      %p38 = scmp.eq.s32.totalorder %s18, 0
      %p39 = por %p37, %p38
      %p40 = scmp.ne.s32.totalorder %s26, %s27
      %p41 = scmp.eq.s32.totalorder %s19, 1
      %p42 = por %p40, %p41
      %p44 = scmp.ne.s32.totalorder %s27, %s43
      %p45 = scmp.eq.s32.totalorder %s19, 0
      %p46 = por %p44, %p45
      %s48 = sadd.s32 %s47, 1
      %p51 = scmp.eq.s32.totalorder %s13, 1
      %p52 = scmp.ne.s32.totalorder %s47, %s49
      %p53 = scmp.eq.s32.totalorder %s13, 0
      %p54 = por %p52, %p53
      %p55 = scmp.ne.s32.totalorder %s47, %s49
      %p56 = scmp.eq.s32.totalorder %s18, 1
      %p57 = por %p55, %p56
      %p58 = scmp.ne.s32.totalorder %s49, %s50
      %p59 = scmp.eq.s32.totalorder %s18, 0
      %p60 = por %p58, %p59
      %p61 = scmp.ne.s32.totalorder %s49, %s50
      %p62 = scmp.eq.s32.totalorder %s19, 1
      %p63 = por %p61, %p62
      %p65 = scmp.ne.s32.totalorder %s50, %s64
      %p66 = scmp.eq.s32.totalorder %s19, 0
      %p67 = por %p65, %p66
      %s69 = sadd.s32 %s68, 1
      %p72 = scmp.eq.s32.totalorder %s13, 1
      %p73 = scmp.ne.s32.totalorder %s68, %s70
      %p74 = scmp.eq.s32.totalorder %s13, 0
      %p75 = por %p73, %p74
      %p76 = scmp.ne.s32.totalorder %s68, %s70
      %p77 = scmp.eq.s32.totalorder %s18, 1
      %p78 = por %p76, %p77
      %p79 = scmp.ne.s32.totalorder %s70, %s71
      %p80 = scmp.eq.s32.totalorder %s18, 0
      %p81 = por %p79, %p80
      %p82 = scmp.ne.s32.totalorder %s70, %s71
      %p83 = scmp.eq.s32.totalorder %s19, 1
      %p84 = por %p82, %p83
      %p86 = scmp.ne.s32.totalorder %s71, %s85
      %p87 = scmp.eq.s32.totalorder %s19, 0
      %p88 = por %p86, %p87
      %s90 = sadd.s32 %s89, 1
      %p93 = scmp.eq.s32.totalorder %s13, 1
      %p94 = scmp.ne.s32.totalorder %s89, %s91
      %p95 = scmp.eq.s32.totalorder %s13, 0
      %p96 = por %p94, %p95
      %p97 = scmp.ne.s32.totalorder %s89, %s91
      %p98 = scmp.eq.s32.totalorder %s18, 1
      %p99 = por %p97, %p98
      %p100 = scmp.ne.s32.totalorder %s91, %s92
      %p101 = scmp.eq.s32.totalorder %s18, 0
      %p102 = por %p100, %p101
      %p103 = scmp.ne.s32.totalorder %s91, %s92
      %p104 = scmp.eq.s32.totalorder %s19, 1
      %p105 = por %p103, %p104
      %p107 = scmp.ne.s32.totalorder %s92, %s106
      %p108 = scmp.eq.s32.totalorder %s19, 0
      %p109 = por %p107, %p108
      %s111 = sadd.s32 %s110, 1
      %p114 = scmp.eq.s32.totalorder %s13, 1
      %p115 = scmp.ne.s32.totalorder %s110, %s112
      %p116 = scmp.eq.s32.totalorder %s13, 0
      %p117 = por %p115, %p116
      %p118 = scmp.ne.s32.totalorder %s110, %s112
      %p119 = scmp.eq.s32.totalorder %s18, 1
      %p120 = por %p118, %p119
      %p121 = scmp.ne.s32.totalorder %s112, %s113
      %p122 = scmp.eq.s32.totalorder %s18, 0
      %p123 = por %p121, %p122
      %p124 = scmp.ne.s32.totalorder %s112, %s113
      %p125 = scmp.eq.s32.totalorder %s19, 1
      %p126 = por %p124, %p125
      %p128 = scmp.ne.s32.totalorder %s113, %s127
      %p129 = scmp.eq.s32.totalorder %s19, 0
      %p130 = por %p128, %p129
      %s131 = ssub.s32 %s13, %s20
      %p132 = scmp.eq.s32.totalorder %s131, 0
      %s134 = sadd.s32 %s133, 1
      %s135 = scalar_select %p132, %s133, %s134
      %p138 = pneg %p132
      %p139 = scmp.eq.s32.totalorder %s13, 1
      %p140 = por %p138, %p139
      %p141 = scmp.ne.s32.totalorder %s133, %s136
      %p142 = scmp.eq.s32.totalorder %s13, 0
      %p143 = por %p141, %p142
      %p144 = scmp.ne.s32.totalorder %s133, %s136
      %p145 = scmp.eq.s32.totalorder %s18, 1
      %p146 = por %p144, %p145
      %p147 = scmp.ne.s32.totalorder %s136, %s137
      %p148 = scmp.eq.s32.totalorder %s18, 0
      %p149 = por %p147, %p148
      %p150 = scmp.ne.s32.totalorder %s136, %s137
      %p151 = scmp.eq.s32.totalorder %s19, 1
      %p152 = por %p150, %p151
      %p154 = scmp.ne.s32.totalorder %s137, %s153
      %p155 = scmp.eq.s32.totalorder %s19, 0
      %p156 = por %p154, %p155
      %p157 = scmp.le.s32.totalorder 1, %s13
      %p158 = scmp.lt.s32.totalorder %s13, 3
      %p159 = pnand %p157, %p158
      %p160 = pneg %p159
      // Predicated region
      $region9: #{mlp_to_k_vecs_stacked.1} parent=5 // pred_check
        _
      $region10: #{mlp_to_k_vecs_stacked.1} parent=5 // pred_check_branch
        %162 = sbr.rel (%p159) target = $region12
      $region11: #{mlp_to_k_vecs_stacked.1} parent=5 // pred_region
        %s163 = ssub.s32 %s13, 1
        // Predicated region
        $region13: #{mlp_to_k_vecs_stacked.1} parent=11 // pred_check
          %p164 = pneg %p60
        $region14: #{mlp_to_k_vecs_stacked.1} parent=11 // pred_check_branch
          %166 = sbr.rel (%p164) target = $region16
        $region15: #{mlp_to_k_vecs_stacked.1} parent=11 // pred_region
          %s168 = ssub.s32 1024, 1024
          %169 = vsyncadd [#allocation3], %s168
          %s170 = sshll.u32 [#allocation2], 4
          %s171 = int_to_ptr.vmem [resolvable:$true] %s170
          %176 = dma.hbm_to_vmem [thread:$0]  %s1, 1024, %s171, [#allocation3], 256, 256, 16
        $region16: #{mlp_to_k_vecs_stacked.1} parent=11 // pred_fallthru
          _
        // Predicated region
        $region17: #{mlp_to_k_vecs_stacked.1} parent=11 // pred_check
          %p177 = pneg %p81
        $region18: #{mlp_to_k_vecs_stacked.1} parent=11 // pred_check_branch
          %179 = sbr.rel (%p177) target = $region20
        $region19: #{mlp_to_k_vecs_stacked.1} parent=11 // pred_region
          _
        $region20: #{mlp_to_k_vecs_stacked.1} parent=11 // pred_fallthru
          _
        // Predicated region
        $region21: #{mlp_to_k_vecs_stacked.1} parent=11 // pred_check
          %p180 = pneg %p102
        $region22: #{mlp_to_k_vecs_stacked.1} parent=11 // pred_check_branch
          %182 = sbr.rel (%p180) target = $region24
        $region23: #{mlp_to_k_vecs_stacked.1} parent=11 // pred_region
          %s184 = ssub.s32 4096, 4096
          %185 = vsyncadd [#allocation5], %s184
          %s186 = sshll.u32 [#allocation4], 4
          %s187 = int_to_ptr.vmem [resolvable:$true] %s186
          %192 = dma.hbm_to_vmem [thread:$0]  %s3, 4096, %s187, [#allocation5], 128, 128, 8
        $region24: #{mlp_to_k_vecs_stacked.1} parent=11 // pred_fallthru
          _
        // Predicated region
        $region25: #{mlp_to_k_vecs_stacked.1} parent=11 // pred_check
          %p193 = pneg %p123
        $region26: #{mlp_to_k_vecs_stacked.1} parent=11 // pred_check_branch
          %195 = sbr.rel (%p193) target = $region28
        $region27: #{mlp_to_k_vecs_stacked.1} parent=11 // pred_region
          _
        $region28: #{mlp_to_k_vecs_stacked.1} parent=11 // pred_fallthru
          _
      $region12: #{mlp_to_k_vecs_stacked.1} parent=5 // pred_fallthru
        _
      %p196 = scmp.lt.s32.totalorder %s13, 2
      // Predicated region
      $region29: #{mlp_to_k_vecs_stacked.1} parent=5 // pred_check
        %p197 = pneg %p196
      $region30: #{mlp_to_k_vecs_stacked.1} parent=5 // pred_check_branch
        %199 = sbr.rel (%p197) target = $region32
      $region31: #{mlp_to_k_vecs_stacked.1} parent=5 // pred_region
        // Predicated region
        $region33: #{mlp_to_k_vecs_stacked.1} parent=31 // pred_check
          %p200 = pneg %p33
        $region34: #{mlp_to_k_vecs_stacked.1} parent=31 // pred_check_branch
          %202 = sbr.rel (%p200) target = $region36
        $region35: #{mlp_to_k_vecs_stacked.1} parent=31 // pred_region
          %p203 = scmp.lt.s32.totalorder %s13, 1
          %s204 = scalar_select %p203, %s13, 1
          %s205 = smul.addr %s204, 8
          %s206 = scalar_lea.vmem %s0, %s205
        $region36: #{mlp_to_k_vecs_stacked.1} parent=31 // pred_fallthru
          _
      $region32: #{mlp_to_k_vecs_stacked.1} parent=5 // pred_fallthru
        _
      %p207 = scmp.le.s32.totalorder 1, %s13
      %p208 = scmp.lt.s32.totalorder %s13, 3
      %p209 = pnand %p207, %p208
      %p210 = pneg %p209
      // Predicated region
      $region37: #{mlp_to_k_vecs_stacked.1} parent=5 // pred_check
        _
      $region38: #{mlp_to_k_vecs_stacked.1} parent=5 // pred_check_branch
        %212 = sbr.rel (%p209) target = $region40
      $region39: #{mlp_to_k_vecs_stacked.1} parent=5 // pred_region
        %s213 = ssub.s32 %s13, 1
        // Predicated region
        $region41: #{mlp_to_k_vecs_stacked.1} parent=39 // pred_check
          %p214 = pneg %p60
        $region42: #{mlp_to_k_vecs_stacked.1} parent=39 // pred_check_branch
          %216 = sbr.rel (%p214) target = $region44
        $region43: #{mlp_to_k_vecs_stacked.1} parent=39 // pred_region
          %217 = dma.done [#allocation3], 1024
        $region44: #{mlp_to_k_vecs_stacked.1} parent=39 // pred_fallthru
          _
        // Predicated region
        $region45: #{mlp_to_k_vecs_stacked.1} parent=39 // pred_check
          %p218 = pneg %p102
        $region46: #{mlp_to_k_vecs_stacked.1} parent=39 // pred_check_branch
          %220 = sbr.rel (%p218) target = $region48
        $region47: #{mlp_to_k_vecs_stacked.1} parent=39 // pred_region
          %221 = dma.done [#allocation5], 4096
        $region48: #{mlp_to_k_vecs_stacked.1} parent=39 // pred_fallthru
          _
        %p222 = scmp.lt.s32.totalorder %s18, 1
        %s223 = scalar_select %p222, %s18, 1
        %s224 = smul.addr %s223, 8
        %s225 = scalar_lea.vmem %s0, %s224
        %p226 = pneg %p39
        %p227 = pneg %p36
        %p228 = pneg %p60
        %p229 = pneg %p57
        %p230 = pneg %p81
        %p231 = pneg %p78
        %p232 = pneg %p102
        %p233 = pneg %p99
        %p234 = pneg %p123
        %p235 = pneg %p120
        %p236 = pneg %p149
        %p237 = pneg %p146
        %p238 = scmp.lt.s32.totalorder %s18, 1
        %s239 = scalar_select %p238, %s18, 1
        %s240 = smul.addr %s239, 8
        %s241 = scalar_lea.vmem %s5, %s240
        %p242 = scmp.lt.s32.totalorder %s18, 1
        %s243 = scalar_select %p242, %s18, 1
        %s244 = smul.addr %s243, 8
        %s245 = scalar_lea.vmem %s0, %s244
        %p246 = scmp.lt.s32.totalorder %s18, 1
        %s247 = scalar_select %p246, %s18, 1
        %s248 = smul.addr %s247, 8
        %s249 = scalar_lea.vmem %s5, %s248
        %v250 = vld [vmem:[%s245] sm:$0xff]
        %v251 = vld [vmem:[#allocation2] sm:$0xff]
        %v252 = vld [vmem:[#allocation2 + $0x8] sm:$0xff]
        %v253 = vld [vmem:[#allocation2 + $0x10] sm:$0xff]
        %v254 = vld [vmem:[#allocation2 + $0x18] sm:$0xff]
        %v255 = vld [vmem:[#allocation2 + $0x20] sm:$0xff]
        %v256 = vld [vmem:[#allocation2 + $0x28] sm:$0xff]
        %v257 = vld [vmem:[#allocation2 + $0x30] sm:$0xff]
        %v258 = vld [vmem:[#allocation2 + $0x38] sm:$0xff]
        %v259 = vld [vmem:[%s2] sm:$0x3]
        %v261 = vlaneseq
        %v262 = vshrl.u32 %v261, 7
        %v263 = vsub.s32 0, %v262
        %v264 = vrot.slane %v259, %v263
        %v265 = vlaneseq
        %v266 = vshrl.u32 %v265, 7
        %v267 = vsub.s32 1, %v266
        %v268 = vrot.slane %v259, %v267
        %vm271 = vcmask 261120
        %v273 = vsel %vm271, %v250, 0
        %275 = vmatprep.subr.mxu0 %v252
        %276 = vmatpush1.msra.mxu0 %v251
        %277 = vmatprep.subr.mxu0 %v254
        %278 = vmatpush1.msra.mxu0 %v253
        %279 = vmatprep.subr.mxu0 %v256
        %280 = vmatpush1.msra.mxu0 %v255
        %281 = vmatprep.subr.mxu0 %v258
        %282 = vmatpush1.msra.mxu0 %v257
        %283 = vmatprep.subr.mxu0 0.0
        %284 = vmatpush1.msra.mxu0 0.0
        %285 = vmatprep.subr.mxu0 0.0
        %286 = vmatpush1.msra.mxu0 0.0
        %287 = vmatprep.subr.mxu0 0.0
        %288 = vmatpush1.msra.mxu0 0.0
        %289 = vmatprep.subr.mxu0 0.0
        %290 = vmatpush1.msra.mxu0 0.0
        %291 = vmatprep.subr.mxu0 0.0
        %292 = vmatpush1.msra.mxu0 0.0
        %293 = vmatprep.subr.mxu0 0.0
        %294 = vmatpush1.msra.mxu0 0.0
        %295 = vmatprep.subr.mxu0 0.0
        %296 = vmatpush1.msra.mxu0 0.0
        %297 = vmatprep.subr.mxu0 0.0
        %298 = vmatpush1.msra.mxu0 0.0
        %299 = vmatprep.subr.mxu0 0.0
        %300 = vmatpush1.msra.mxu0 0.0
        %301 = vmatprep.subr.mxu0 0.0
        %302 = vmatpush1.msra.mxu0 0.0
        %303 = vmatprep.subr.mxu0 0.0
        %304 = vmatpush1.msra.mxu0 0.0
        %305 = vmatprep.subr.mxu0 0.0
        %306 = vmatpush1.msra.mxu0 0.0
        %307 = vmatprep.subr.mxu0 0.0
        %308 = vmatpush1.msra.mxu0 0.0
        %309 = vmatprep.subr.mxu0 0.0
        %310 = vmatpush1.msra.mxu0 0.0
        %311 = vmatprep.subr.mxu0 0.0
        %312 = vmatpush1.msra.mxu0 0.0
        %313 = vmatprep.subr.mxu0 0.0
        %314 = vmatpush1.msra.mxu0 0.0
        %315 = vmatprep.subr.mxu0 0.0
        %316 = vmatpush1.msra.mxu0 0.0
        %317 = vmatprep.subr.mxu0 0.0
        %318 = vmatpush1.msra.mxu0 0.0
        %319 = vmatprep.subr.mxu0 0.0
        %320 = vmatpush1.msra.mxu0 0.0
        %321 = vmatprep.subr.mxu0 0.0
        %322 = vmatpush1.msra.mxu0 0.0
        %323 = vmatprep.subr.mxu0 0.0
        %324 = vmatpush1.msra.mxu0 0.0
        %325 = vmatprep.subr.mxu0 0.0
        %326 = vmatpush1.msra.mxu0 0.0
        %327 = vmatprep.subr.mxu0 0.0
        %328 = vmatpush1.msra.mxu0 0.0
        %329 = vmatprep.subr.mxu0 0.0
        %330 = vmatpush1.msra.mxu0 0.0
        %331 = vmatprep.subr.mxu0 0.0
        %332 = vmatpush1.msra.mxu0 0.0
        %333 = vmatprep.subr.mxu0 0.0
        %334 = vmatpush1.msra.mxu0 0.0
        %335 = vmatprep.subr.mxu0 0.0
        %336 = vmatpush1.msra.mxu0 0.0
        %337 = vmatprep.subr.mxu0 0.0
        %338 = vmatpush1.msra.mxu0 0.0
        %339 = vmatprep.mubr.f32.mxu0 0.0
        %340 = vmatmul.mubr.f32.gmra.mrb[0].mxu0 %v273
        %v341 = vpop.f32.mrb[0].mxu0
        %v342 = vadd.f32 %v264, %v341
        %v343 = vpop.f32.mrb[0].mxu0
        %v344 = vadd.f32 %v268, %v343
        %345 = vdwg.mxu0
        %v346 = vtanh.pop %v342
        %v347 = vtanh.pop %v344
        %v348 = vld [vmem:[#allocation4] sm:$0xff]
        %v349 = vld [vmem:[#allocation4 + $0x8] sm:$0xff]
        %v350 = vld [vmem:[#allocation4 + $0x10] sm:$0xff]
        %v351 = vld [vmem:[#allocation4 + $0x18] sm:$0xff]
        %v352 = vld [vmem:[#allocation4 + $0x20] sm:$0xff]
        %v353 = vld [vmem:[#allocation4 + $0x28] sm:$0xff]
        %v354 = vld [vmem:[#allocation4 + $0x30] sm:$0xff]
        %v355 = vld [vmem:[#allocation4 + $0x38] sm:$0xff]
        %v356 = vld [vmem:[#allocation4 + $0x40] sm:$0xff]
        %v357 = vld [vmem:[#allocation4 + $0x48] sm:$0xff]
        %v358 = vld [vmem:[#allocation4 + $0x50] sm:$0xff]
        %v359 = vld [vmem:[#allocation4 + $0x58] sm:$0xff]
        %v360 = vld [vmem:[#allocation4 + $0x60] sm:$0xff]
        %v361 = vld [vmem:[#allocation4 + $0x68] sm:$0xff]
        %v362 = vld [vmem:[#allocation4 + $0x70] sm:$0xff]
        %v363 = vld [vmem:[#allocation4 + $0x78] sm:$0xff]
        %v364 = vld [vmem:[#allocation4 + $0x80] sm:$0xff]
        %v365 = vld [vmem:[#allocation4 + $0x88] sm:$0xff]
        %v366 = vld [vmem:[#allocation4 + $0x90] sm:$0xff]
        %v367 = vld [vmem:[#allocation4 + $0x98] sm:$0xff]
        %v368 = vld [vmem:[#allocation4 + $0xa0] sm:$0xff]
        %v369 = vld [vmem:[#allocation4 + $0xa8] sm:$0xff]
        %v370 = vld [vmem:[#allocation4 + $0xb0] sm:$0xff]
        %v371 = vld [vmem:[#allocation4 + $0xb8] sm:$0xff]
        %v372 = vld [vmem:[#allocation4 + $0xc0] sm:$0xff]
        %v373 = vld [vmem:[#allocation4 + $0xc8] sm:$0xff]
        %v374 = vld [vmem:[#allocation4 + $0xd0] sm:$0xff]
        %v375 = vld [vmem:[#allocation4 + $0xd8] sm:$0xff]
        %v376 = vld [vmem:[#allocation4 + $0xe0] sm:$0xff]
        %v377 = vld [vmem:[#allocation4 + $0xe8] sm:$0xff]
        %v378 = vld [vmem:[#allocation4 + $0xf0] sm:$0xff]
        %v379 = vld [vmem:[#allocation4 + $0xf8] sm:$0xff]
        %v380 = vld [vmem:[%s4] sm:$0x1]
        %v382 = vlaneseq
        %v383 = vshrl.u32 %v382, 7
        %v384 = vsub.s32 0, %v383
        %v385 = vrot.slane %v380, %v384
        %387 = vmatprep.subr.mxu0 0.0
        %388 = vmatpush1.msra.mxu0 %v348
        %389 = vmatprep.subr.mxu0 0.0
        %390 = vmatpush1.msra.mxu0 %v349
        %391 = vmatprep.subr.mxu0 0.0
        %392 = vmatpush1.msra.mxu0 %v350
        %393 = vmatprep.subr.mxu0 0.0
        %394 = vmatpush1.msra.mxu0 %v351
        %395 = vmatprep.subr.mxu0 0.0
        %396 = vmatpush1.msra.mxu0 %v352
        %397 = vmatprep.subr.mxu0 0.0
        %398 = vmatpush1.msra.mxu0 %v353
        %399 = vmatprep.subr.mxu0 0.0
        %400 = vmatpush1.msra.mxu0 %v354
        %401 = vmatprep.subr.mxu0 0.0
        %402 = vmatpush1.msra.mxu0 %v355
        %403 = vmatprep.subr.mxu0 0.0
        %404 = vmatpush1.msra.mxu0 %v356
        %405 = vmatprep.subr.mxu0 0.0
        %406 = vmatpush1.msra.mxu0 %v357
        %407 = vmatprep.subr.mxu0 0.0
        %408 = vmatpush1.msra.mxu0 %v358
        %409 = vmatprep.subr.mxu0 0.0
        %410 = vmatpush1.msra.mxu0 %v359
        %411 = vmatprep.subr.mxu0 0.0
        %412 = vmatpush1.msra.mxu0 %v360
        %413 = vmatprep.subr.mxu0 0.0
        %414 = vmatpush1.msra.mxu0 %v361
        %415 = vmatprep.subr.mxu0 0.0
        %416 = vmatpush1.msra.mxu0 %v362
        %417 = vmatprep.subr.mxu0 0.0
        %418 = vmatpush1.msra.mxu0 %v363
        %419 = vmatprep.subr.mxu0 0.0
        %420 = vmatpush1.msra.mxu0 %v364
        %421 = vmatprep.subr.mxu0 0.0
        %422 = vmatpush1.msra.mxu0 %v365
        %423 = vmatprep.subr.mxu0 0.0
        %424 = vmatpush1.msra.mxu0 %v366
        %425 = vmatprep.subr.mxu0 0.0
        %426 = vmatpush1.msra.mxu0 %v367
        %427 = vmatprep.subr.mxu0 0.0
        %428 = vmatpush1.msra.mxu0 %v368
        %429 = vmatprep.subr.mxu0 0.0
        %430 = vmatpush1.msra.mxu0 %v369
        %431 = vmatprep.subr.mxu0 0.0
        %432 = vmatpush1.msra.mxu0 %v370
        %433 = vmatprep.subr.mxu0 0.0
        %434 = vmatpush1.msra.mxu0 %v371
        %435 = vmatprep.subr.mxu0 0.0
        %436 = vmatpush1.msra.mxu0 %v372
        %437 = vmatprep.subr.mxu0 0.0
        %438 = vmatpush1.msra.mxu0 %v373
        %439 = vmatprep.subr.mxu0 0.0
        %440 = vmatpush1.msra.mxu0 %v374
        %441 = vmatprep.subr.mxu0 0.0
        %442 = vmatpush1.msra.mxu0 %v375
        %443 = vmatprep.subr.mxu0 0.0
        %444 = vmatpush1.msra.mxu0 %v376
        %445 = vmatprep.subr.mxu0 0.0
        %446 = vmatpush1.msra.mxu0 %v377
        %447 = vmatprep.subr.mxu0 0.0
        %448 = vmatpush1.msra.mxu0 %v378
        %449 = vmatprep.subr.mxu0 0.0
        %450 = vmatpush1.msra.mxu0 %v379
        %451 = vmatprep.mubr.f32.mxu0 %v347
        %452 = vmatmul.mubr.f32.gmra.mrb[0].mxu0 %v346
        %v453 = vpop.f32.mrb[0].mxu0
        %v454 = vadd.f32 %v385, %v453
        %v455 = vpop.f32.mrb[0].mxu0
        %456 = vdwg.mxu0
        %457 = vst [vmem:[%s249] sm:$0xff] %v454
        %p458 = scmp.lt.s32.totalorder %s18, 1
        %s459 = scalar_select %p458, %s18, 1
        %s460 = smul.addr %s459, 8
        %s461 = scalar_lea.vmem %s5, %s460
        // Predicated region
        $region49: #{mlp_to_k_vecs_stacked.1} parent=39 // pred_check
          %p462 = pneg %p146
        $region50: #{mlp_to_k_vecs_stacked.1} parent=39 // pred_check_branch
          %464 = sbr.rel (%p462) target = $region52
        $region51: #{mlp_to_k_vecs_stacked.1} parent=39 // pred_region
          _
        $region52: #{mlp_to_k_vecs_stacked.1} parent=39 // pred_fallthru
          _
      $region40: #{mlp_to_k_vecs_stacked.1} parent=5 // pred_fallthru
        _
      %p465 = scmp.le.s32.totalorder 2, %s13
      // Predicated region
      $region53: #{mlp_to_k_vecs_stacked.1} parent=5 // pred_check
        %p466 = pneg %p465
      $region54: #{mlp_to_k_vecs_stacked.1} parent=5 // pred_check_branch
        %468 = sbr.rel (%p466) target = $region56
      $region55: #{mlp_to_k_vecs_stacked.1} parent=5 // pred_region
        %s469 = ssub.s32 %s13, 2
        // Predicated region
        $region57: #{mlp_to_k_vecs_stacked.1} parent=55 // pred_check
          %p470 = pneg %p152
        $region58: #{mlp_to_k_vecs_stacked.1} parent=55 // pred_check_branch
          %472 = sbr.rel (%p470) target = $region60
        $region59: #{mlp_to_k_vecs_stacked.1} parent=55 // pred_region
          %p473 = scmp.lt.s32.totalorder %s19, 1
          %s474 = scalar_select %p473, %s19, 1
          %s475 = smul.addr %s474, 8
          %s476 = scalar_lea.vmem %s5, %s475
        $region60: #{mlp_to_k_vecs_stacked.1} parent=55 // pred_fallthru
          _
      $region56: #{mlp_to_k_vecs_stacked.1} parent=5 // pred_fallthru
        _
    $region6: #{mlp_to_k_vecs_stacked.1} parent=1 // loop_footer
      %s17 = sadd.s32 1, %s13
    $region7: #{mlp_to_k_vecs_stacked.1} parent=1 // loop_footer_branch
      %12 = sbr.rel target = $region3
    $region8: #{mlp_to_k_vecs_stacked.1} parent=1 // loop_exit
      _
    %477 = vsyncpa [#allocation3], 1
    %s478 = scalar_lea.sflag [#allocation3], 1
    %479 = vsyncpa %s478, 1
    %480 = vsyncpa [#allocation5], 1

</llo_original>
